<compile_context>
chip_gen: v7x
topology: tpu7x:2x2x1
jax: 0.10.0
libtpu: 0.0.40
codegen_flags: <defaults>
</compile_context>

<pallas_src>
import functools
import math

import jax
import jax.numpy as jnp
from jax.experimental import pallas as pl
from jax.experimental.pallas import tpu as pltpu


def _round_up(x, m):
    return ((x + m - 1) // m) * m


def _cdiv(a, b):
    return (a + b - 1) // b


def _acc_kernel(logits_ref, targets_ref, out_ref, m_scr, idx_scr, *,
                n_rows, n_classes, multi_class_blocks, mask_class_lanes):
    """Grid = (row_blocks, class_blocks); class axis is the reduction axis.

    logits_ref : (TM, TV) native-dtype logits tile
    targets_ref: (TM, 1)  int32 targets (same block for every class step)
    out_ref    : (1, 8, 128) int32 per-row-block correct count (lane-dense)
    m_scr      : (TM, 1)  f32   running row max      (used when class-tiled)
    idx_scr    : (TM, 1)  int32 running first-argmax (used when class-tiled)
    """
    i = pl.program_id(0)
    j = pl.program_id(1)
    nv = pl.num_programs(1)
    tm, tv = logits_ref.shape

    x = logits_ref[...]                                        # native dtype
    lane = jax.lax.broadcasted_iota(jnp.int32, (1, tv), 1)     # (1, TV) row

    if mask_class_lanes:  # static: only traced when V % tv != 0
        neg = jnp.asarray(-jnp.inf, dtype=x.dtype)
        x = jnp.where(lane + j * tv < n_classes, x, neg)

    local_max = jnp.max(x, axis=-1, keepdims=True)             # (TM, 1)
    # First maximal index inside this class tile (first-index tie-break).
    local_idx = jnp.min(
        jnp.where(x == local_max, lane, jnp.int32(tv)),
        axis=-1, keepdims=True) + j * tv                        # (TM, 1) int32

    def finalize(idx):
        row = jax.lax.broadcasted_iota(jnp.int32, (tm, 1), 0)
        row_valid = (i * tm + row) < n_rows                     # mask OOB rows
        correct = jnp.where(row_valid & (idx == targets_ref[...]),
                            jnp.int32(1), jnp.int32(0))
        count = jnp.sum(correct)
        out_ref[...] = jnp.broadcast_to(count, out_ref.shape).astype(jnp.int32)

    if multi_class_blocks:
        local_max_f = local_max.astype(jnp.float32)

        @pl.when(j == 0)
        def _init():
            m_scr[...] = local_max_f
            idx_scr[...] = local_idx

        @pl.when(j > 0)
        def _update():
            take = local_max_f > m_scr[...]   # strict >: earlier tile wins ties
            m_scr[...] = jnp.where(take, local_max_f, m_scr[...])
            idx_scr[...] = jnp.where(take, local_idx, idx_scr[...])

        @pl.when(j == nv - 1)
        def _fin():
            finalize(idx_scr[...])
    else:
        # Whole class axis in one tile: no cross-tile state needed.
        finalize(local_idx)


def _vmem_caps():
    """Generation-aware (per-buffer budget, vmem_limit_bytes)."""
    cap = None
    try:
        info = pltpu.get_tpu_info()
        cap = getattr(info, "vmem_capacity_bytes", None)
    except Exception:
        cap = None
    if not cap:
        cap = 64 * 1024 * 1024                  # conservative (v7x per-TC)
    if cap >= 100 * 1024 * 1024:                # v5e / v6e: 128 MiB VMEM
        return 10 * 1024 * 1024, 64 * 1024 * 1024
    return 6 * 1024 * 1024, 40 * 1024 * 1024    # v7x / unknown: stay capped


def _choose_tiles(n_rows, n_classes, itemsize, budget):
    """Pick (tm, tv): prefer whole-V tiles; keep >=2 row blocks when possible."""
    n_rows8 = _round_up(max(n_rows, 1), 8)
    if n_classes * itemsize * 8 <= budget:
        tv = n_classes                           # whole class axis in one tile
    else:
        # Largest lane-aligned class chunk that still leaves room for 8 rows.
        tv = (budget // (8 * itemsize)) // 128 * 128
        tv = max(128, tv)
    tm = budget // max(1, tv * itemsize)
    tm = max(8, min(1024, (tm // 8) * 8))
    tm = min(tm, n_rows8)
    # Keep at least 2 row blocks for megacore (v7x) when the row count allows.
    if n_rows8 > 8:
        tm = min(tm, max(8, _round_up(_cdiv(n_rows8, 2), 8)))
    return tm, tv


def accuracy_3d(logits, targets, *, tm=None, tv=None):
    """Pallas equivalent of Accuracy3D.forward on a single device.

    logits : [..., V] float (or int, cast to f32)
    targets: [...]    int
    returns: scalar int32 count of correct predictions.
    """
    *lead, V = logits.shape
    N = int(math.prod(lead)) if lead else 1

    if not jnp.issubdtype(logits.dtype, jnp.floating):
        logits = logits.astype(jnp.float32)
    itemsize = jnp.dtype(logits.dtype).itemsize

    budget, vmem_limit = _vmem_caps()
    auto_tm, auto_tv = _choose_tiles(N, V, itemsize, budget)
    tm = auto_tm if tm is None else int(tm)
    tv = auto_tv if tv is None else int(tv)
    if tm % 8 != 0:
        raise ValueError(f"tm must be a multiple of 8, got {tm}")
    if tv != V and tv % 128 != 0:
        raise ValueError(f"tv must equal V or be a multiple of 128, got {tv}")

    logits2d = logits.reshape(N, V)                      # no padding, no copy
    targets2d = targets.reshape(N, 1).astype(jnp.int32)

    grid = (_cdiv(N, tm), _cdiv(V, tv))
    num_row_blocks, num_class_blocks = grid

    kernel = functools.partial(
        _acc_kernel,
        n_rows=N,
        n_classes=V,
        multi_class_blocks=(num_class_blocks > 1),
        mask_class_lanes=(V % tv != 0),
    )

    cost = pl.CostEstimate(
        flops=0,
        transcendentals=0,
        bytes_accessed=N * V * itemsize + N * 4 + num_row_blocks * 8 * 128 * 4,
    )

    counts = pl.pallas_call(
        kernel,
        out_shape=jax.ShapeDtypeStruct((num_row_blocks, 8, 128), jnp.int32),
        grid_spec=pltpu.PrefetchScalarGridSpec(
            num_scalar_prefetch=0,
            grid=grid,
            in_specs=[
                pl.BlockSpec((tm, tv), lambda i, j: (i, j)),   # logits tile
                pl.BlockSpec((tm, 1), lambda i, j: (i, 0)),    # targets tile
            ],
            out_specs=pl.BlockSpec((1, 8, 128), lambda i, j: (i, 0, 0)),
            scratch_shapes=[
                pltpu.VMEM((tm, 1), jnp.float32),   # running row max
                pltpu.VMEM((tm, 1), jnp.int32),     # running first-argmax
            ],
        ),
        compiler_params=pltpu.CompilerParams(
            dimension_semantics=("parallel", "arbitrary"),
            vmem_limit_bytes=vmem_limit,
        ),
        cost_estimate=cost,
    )(logits2d, targets2d)

    # TODO(synk): reduce_by_batch_3d is a cross-device all-reduce over the
    # INPUT_GROUP_3D / WEIGHT_GROUP_3D process groups; identity on one device.
    return jnp.sum(counts[:, 0, 0])


def _reference(logits, targets):
    preds = jnp.argmax(logits, axis=-1)
    return jnp.sum((preds == targets).astype(jnp.int32))


if __name__ == "__main__":
    key = jax.random.PRNGKey(0)

    # 1) Small f32 case (auto tile selection; whole-V tile, 2 row blocks).
    k1, k2 = jax.random.split(key)
    B, S, V = 2, 8, 32
    logits = jax.random.normal(k1, (B, S, V), dtype=jnp.float32)
    targets = jax.random.randint(k2, (B, S), 0, V, dtype=jnp.int32)
    out = jax.block_until_ready(accuracy_3d(logits, targets))
    ref = _reference(logits, targets)
    assert int(out) == int(ref), f"f32 mismatch: kernel={int(out)} ref={int(ref)}"

    # 2) bf16 logits streamed and compared in native dtype.
    k3, k4 = jax.random.split(k1)
    logits_bf16 = jax.random.normal(k3, (B, S, V), dtype=jnp.float32).astype(jnp.bfloat16)
    targets_b = jax.random.randint(k4, (B, S), 0, V, dtype=jnp.int32)
    out_b = jax.block_until_ready(accuracy_3d(logits_bf16, targets_b))
    ref_b = _reference(logits_bf16, targets_b)
    assert int(out_b) == int(ref_b), f"bf16 mismatch: kernel={int(out_b)} ref={int(ref_b)}"

    # 3) Ragged row count (OOB-row masking) + forced class-axis tiling.
    k5, k6 = jax.random.split(k3)
    B3, S3, V3 = 3, 5, 256
    logits3 = jax.random.normal(k5, (B3, S3, V3), dtype=jnp.float32)
    targets3 = jax.random.randint(k6, (B3, S3), 0, V3, dtype=jnp.int32)
    out3 = jax.block_until_ready(accuracy_3d(logits3, targets3, tm=8, tv=128))
    ref3 = _reference(logits3, targets3)
    assert int(out3) == int(ref3), f"tiled-V mismatch: kernel={int(out3)} ref={int(ref3)}"

    # 4) Ragged rows AND ragged class axis (OOB class-lane masking, no padding).
    k7, k8 = jax.random.split(k5)
    N4, V4 = 10, 200
    logits4 = jax.random.normal(k7, (N4, V4), dtype=jnp.float32)
    targets4 = jax.random.randint(k8, (N4,), 0, V4, dtype=jnp.int32)
    out4 = jax.block_until_ready(accuracy_3d(logits4, targets4, tm=8, tv=128))
    ref4 = _reference(logits4, targets4)
    assert int(out4) == int(ref4), f"ragged-V mismatch: kernel={int(out4)} ref={int(ref4)}"

    print("KERNEL_OK")
</pallas_src>

<mosaic_0001>
module attributes {stable_mosaic.version = 11 : i64} {
  func.func @_acc_kernel(%arg0: i32, %arg1: i32, %arg2: memref<8x32xf32, #tpu.memory_space<vmem>>, %arg3: memref<8x1xi32, #tpu.memory_space<vmem>>, %arg4: memref<1x8x128xi32, #tpu.memory_space<vmem>>, %arg5: memref<8x1xf32, #tpu.memory_space<vmem>>, %arg6: memref<8x1xi32, #tpu.memory_space<vmem>>) attributes {dimension_semantics = [#tpu.dimension_semantics<parallel>, #tpu.dimension_semantics<arbitrary>], iteration_bounds = array<i64: 2, 1>, scalar_prefetch = 0 : i64, scratch_operands = 2 : i64, tpu.core_type = #tpu.core_type<tc>, window_params = [{transform_indices = @transform_0, window_bounds = array<i64: 8, 32>}, {transform_indices = @transform_1, window_bounds = array<i64: 8, 1>}, {transform_indices = @transform_2, window_bounds = array<i64: 1, 8, 128>}]} {
    %c0 = arith.constant 0 : index
    %c0_0 = arith.constant 0 : index
    %0 = vector.load %arg2[%c0, %c0_0] : memref<8x32xf32, #tpu.memory_space<vmem>>, vector<8x32xf32>
    %1 = tpu.iota {dimensions = array<i32: 1>} : vector<1x32xi32>
    %cst = arith.constant dense<0xFF800000> : vector<8xf32>
    %2 = vector.multi_reduction <maximumf>, %0, %cst [1] : vector<8x32xf32> to vector<8xf32>
    %3 = vector.shape_cast %2 : vector<8xf32> to vector<8x1xf32>
    %4 = vector.broadcast %3 : vector<8x1xf32> to vector<8x32xf32>
    %5 = arith.cmpf oeq, %0, %4 : vector<8x32xf32>
    %c32_i32 = arith.constant 32 : i32
    %6 = vector.shape_cast %1 : vector<1x32xi32> to vector<1x32xi32>
    %7 = vector.broadcast %6 : vector<1x32xi32> to vector<8x32xi32>
    %8 = vector.broadcast %c32_i32 : i32 to vector<8x32xi32>
    %9 = arith.select %5, %7, %8 : vector<8x32xi1>, vector<8x32xi32>
    %cst_1 = arith.constant dense<2147483647> : vector<8xi32>
    %10 = vector.multi_reduction <minsi>, %9, %cst_1 [1] : vector<8x32xi32> to vector<8xi32>
    %11 = vector.shape_cast %10 : vector<8xi32> to vector<8x1xi32>
    %c32_i32_2 = arith.constant 32 : i32
    %12 = arith.muli %arg1, %c32_i32_2 : i32
    %13 = vector.broadcast %12 : i32 to vector<8x1xi32>
    %14 = arith.addi %11, %13 : vector<8x1xi32>
    %15 = tpu.iota {dimensions = array<i32: 0>} : vector<8x1xi32>
    %c8_i32 = arith.constant 8 : i32
    %16 = arith.muli %arg0, %c8_i32 : i32
    %17 = vector.broadcast %16 : i32 to vector<8x1xi32>
    %18 = arith.addi %17, %15 : vector<8x1xi32>
    %c16_i32 = arith.constant 16 : i32
    %19 = vector.broadcast %c16_i32 : i32 to vector<8x1xi32>
    %20 = arith.cmpi slt, %18, %19 : vector<8x1xi32>
    %c0_3 = arith.constant 0 : index
    %c0_4 = arith.constant 0 : index
    %21 = vector.load %arg3[%c0_3, %c0_4] : memref<8x1xi32, #tpu.memory_space<vmem>>, vector<8x1xi32>
    %22 = arith.cmpi eq, %14, %21 : vector<8x1xi32>
    %23 = arith.andi %20, %22 : vector<8x1xi1>
    %c1_i32 = arith.constant 1 : i32
    %c0_i32 = arith.constant 0 : i32
    %24 = vector.broadcast %c1_i32 : i32 to vector<8x1xi32>
    %25 = vector.broadcast %c0_i32 : i32 to vector<8x1xi32>
    %26 = arith.select %23, %24, %25 : vector<8x1xi1>, vector<8x1xi32>
    %27 = vector.shape_cast %26 : vector<8x1xi32> to vector<1x8x1xi32>
    %cst_5 = arith.constant dense<0> : vector<1xi32>
    %28 = vector.multi_reduction <add>, %27, %cst_5 [1, 2] : vector<1x8x1xi32> to vector<1xi32>
    %29 = vector.shape_cast %28 : vector<1xi32> to vector<1x1x1xi32>
    %30 = vector.extract %29[0, 0, 0] : i32 from vector<1x1x1xi32>
    %31 = vector.broadcast %30 : i32 to vector<1x8x128xi32>
    %c0_6 = arith.constant 0 : index
    %c0_7 = arith.constant 0 : index
    %c0_8 = arith.constant 0 : index
    %32 = vector.load %arg4[%c0_6, %c0_7, %c0_8] : memref<1x8x128xi32, #tpu.memory_space<vmem>>, vector<1x8x128xi32>
    tpu.vector_store %arg4[%c0_6, %c0_7, %c0_8], %31 {strides = array<i32>} : memref<1x8x128xi32, #tpu.memory_space<vmem>>, vector<1x8x128xi32>,
    return
  }
  func.func @transform_0(%arg0: i32, %arg1: i32) -> (i32, i32) {
    %c0_i32 = arith.constant 0 : i32
    return %arg0, %arg1 : i32, i32
  }
  func.func @transform_1(%arg0: i32, %arg1: i32) -> (i32, i32) {
    %c0_i32 = arith.constant 0 : i32
    %c0_i32_0 = arith.constant 0 : i32
    return %arg0, %c0_i32 : i32, i32
  }
  func.func @transform_2(%arg0: i32, %arg1: i32) -> (i32, i32, i32) {
    %c0_i32 = arith.constant 0 : i32
    %c0_i32_0 = arith.constant 0 : i32
    %c0_i32_1 = arith.constant 0 : i32
    return %arg0, %c0_i32, %c0_i32_0 : i32, i32, i32
  }
}

</mosaic_0001>

<llo_original>
// kernel: tpu_custom_call.1
$region0: #{tpu_custom_call.1}
  #allocation0 [shape = 'u32[]', space=smem, size = 0x4, offset = 0x4, fixed_abs, tag = 'smem constant byte address 0x4 - core index']
  #allocation1 [shape = 'u32[144,128]{1,0:T(1,128)}', space=vmem, size = 0x12000, scoped, tag = 'internal scratch']
  #allocation2 [shape = 'f32[8,1]{1,0:T(8,128)}', space=vmem, size = 0x1000, scoped, tag = 'scratch operand']
  #allocation3 [shape = 's32[8,1]{1,0:T(8,128)}', space=vmem, size = 0x1000, scoped, tag = 'scratch operand']
  %s0 = inlined_call_operand.vmem [shape: f32[16,32], index: 0, kind: input, shape index: {}]
  %s1 = inlined_call_operand.vmem [shape: s32[16,1], index: 1, kind: input, shape index: {}]
  %s2 = inlined_call_operand.hbm [shape: s32[2,8,128], index: 2, kind: output, shape index: {}]
  %s3 = sld [smem:[#allocation0]]
  $region41: #{tpu_custom_call.1} parent=0
    _
  %s5 = ssub.s32 1, %s3
  %s6 = scalar_select 0, %s5, %s3
  $region1: #{tpu_custom_call.1} parent=0
    #allocation4 [shape = 'u8[8192]{0}', space=vmem, size = 0x2000, scoped, tag = 'output window, operand 0']
    #allocation5 [shape = 's32[2]{0}', space=sflag, size = 0x8, scoped, tag = 'scoped memory for tpu_custom_call.1']
    %7 = vsyncpa [#allocation5], 0
    %s8 = scalar_lea.sflag [#allocation5], 1
    %9 = vsyncpa %s8, 0
    loop: start=0, step=1, limit=4
    $region2: #{tpu_custom_call.1} parent=1 // loop_pre_header
      _
    $region3: #{tpu_custom_call.1} parent=1 // loop_header
      %s11 = sphi 0, %s15
      %p12 = scmp.ge.s32.totalorder %s11, 4
      %s18 = sphi 0, %s30
      %s19 = sphi 0, %s26
      %s20 = sphi 0, %s18
      %s21 = sphi 0, %s19
      %s22 = sphi 0, %s20
      %s23 = sphi 0, %s21
      %s35 = sphi 0, %s37
      %s38 = sphi 0, %s35
      %s39 = sphi 0, %s38
      %s55 = sphi 0, %s39
      %s61 = sphi 0, %s63
      %s64 = sphi 0, %s61
      %s65 = sphi 0, %s64
      %s81 = sphi 0, %s65
      %s87 = sphi 0, %s89
      %s90 = sphi 0, %s87
      %s91 = sphi 0, %s90
      %s107 = sphi 0, %s91
    $region4: #{tpu_custom_call.1} parent=1 // loop_header_branch
      %14 = sbr.rel (%p12) target = $region8
    $region5: #{tpu_custom_call.1} parent=1 // loop_body
      %s16 = ssub.s32 %s11, 1
      %s17 = ssub.s32 %s11, 2
      %s24 = sadd.s32 1, %s19
      %p25 = scmp.ge.s32.totalorder %s24, 1
      %s26 = scalar_select %p25, 0, %s24
      %s27 = sadd.s32 1, %s18
      %s28 = scalar_select %p25, %s27, %s18
      %p29 = scmp.ge.s32.totalorder %s28, 2
      %s30 = scalar_select %p29, 0, %s28
      %s31 = ssub.s32 %s18, %s30
      %s32 = ssub.s32 %s19, %s26
      %s33 = sor.u32 %s31, %s32
      %p34 = scmp.eq.s32.totalorder %s33, 0
      %s36 = sadd.s32 %s35, 1
      %s37 = scalar_select %p34, %s35, %s36
      %p40 = pneg %p34
      %p41 = scmp.eq.s32.totalorder %s11, 1
      %p42 = por %p40, %p41
      %p43 = scmp.ne.s32.totalorder %s35, %s38
      %p44 = scmp.eq.s32.totalorder %s11, 0
      %p45 = por %p43, %p44
      %p46 = scmp.ne.s32.totalorder %s35, %s38
      %p47 = scmp.eq.s32.totalorder %s16, 1
      %p48 = por %p46, %p47
      %p49 = scmp.ne.s32.totalorder %s38, %s39
      %p50 = scmp.eq.s32.totalorder %s16, 0
      %p51 = por %p49, %p50
      %p52 = scmp.ne.s32.totalorder %s38, %s39
      %p53 = scmp.eq.s32.totalorder %s17, 1
      %p54 = por %p52, %p53
      %p56 = scmp.ne.s32.totalorder %s39, %s55
      %p57 = scmp.eq.s32.totalorder %s17, 0
      %p58 = por %p56, %p57
      %s59 = ssub.s32 %s18, %s30
      %p60 = scmp.eq.s32.totalorder %s59, 0
      %s62 = sadd.s32 %s61, 1
      %s63 = scalar_select %p60, %s61, %s62
      %p66 = pneg %p60
      %p67 = scmp.eq.s32.totalorder %s11, 1
      %p68 = por %p66, %p67
      %p69 = scmp.ne.s32.totalorder %s61, %s64
      %p70 = scmp.eq.s32.totalorder %s11, 0
      %p71 = por %p69, %p70
      %p72 = scmp.ne.s32.totalorder %s61, %s64
      %p73 = scmp.eq.s32.totalorder %s16, 1
      %p74 = por %p72, %p73
      %p75 = scmp.ne.s32.totalorder %s64, %s65
      %p76 = scmp.eq.s32.totalorder %s16, 0
      %p77 = por %p75, %p76
      %p78 = scmp.ne.s32.totalorder %s64, %s65
      %p79 = scmp.eq.s32.totalorder %s17, 1
      %p80 = por %p78, %p79
      %p82 = scmp.ne.s32.totalorder %s65, %s81
      %p83 = scmp.eq.s32.totalorder %s17, 0
      %p84 = por %p82, %p83
      %s85 = ssub.s32 %s18, %s30
      %p86 = scmp.eq.s32.totalorder %s85, 0
      %s88 = sadd.s32 %s87, 1
      %s89 = scalar_select %p86, %s87, %s88
      %p92 = pneg %p86
      %p93 = scmp.eq.s32.totalorder %s11, 1
      %p94 = por %p92, %p93
      %p95 = scmp.ne.s32.totalorder %s87, %s90
      %p96 = scmp.eq.s32.totalorder %s11, 0
      %p97 = por %p95, %p96
      %p98 = scmp.ne.s32.totalorder %s87, %s90
      %p99 = scmp.eq.s32.totalorder %s16, 1
      %p100 = por %p98, %p99
      %p101 = scmp.ne.s32.totalorder %s90, %s91
      %p102 = scmp.eq.s32.totalorder %s16, 0
      %p103 = por %p101, %p102
      %p104 = scmp.ne.s32.totalorder %s90, %s91
      %p105 = scmp.eq.s32.totalorder %s17, 1
      %p106 = por %p104, %p105
      %p108 = scmp.ne.s32.totalorder %s91, %s107
      %p109 = scmp.eq.s32.totalorder %s17, 0
      %p110 = por %p108, %p109
      %p111 = scmp.le.s32.totalorder 1, %s11
      %p112 = scmp.lt.s32.totalorder %s11, 3
      %p113 = pnand %p111, %p112
      %p114 = pneg %p113
      // Predicated region
      $region9: #{tpu_custom_call.1} parent=5 // pred_check
        _
      $region10: #{tpu_custom_call.1} parent=5 // pred_check_branch
        %116 = sbr.rel (%p113) target = $region12
      $region11: #{tpu_custom_call.1} parent=5 // pred_region
        %s117 = ssub.s32 %s11, 1
      $region12: #{tpu_custom_call.1} parent=5 // pred_fallthru
        _
      %p118 = scmp.lt.s32.totalorder %s11, 2
      // Predicated region
      $region13: #{tpu_custom_call.1} parent=5 // pred_check
        %p119 = pneg %p118
      $region14: #{tpu_custom_call.1} parent=5 // pred_check_branch
        %121 = sbr.rel (%p119) target = $region16
      $region15: #{tpu_custom_call.1} parent=5 // pred_region
        // Predicated region
        $region17: #{tpu_custom_call.1} parent=15 // pred_check
          %p122 = pneg %p45
        $region18: #{tpu_custom_call.1} parent=15 // pred_check_branch
          %124 = sbr.rel (%p122) target = $region20
        $region19: #{tpu_custom_call.1} parent=15 // pred_region
          %p125 = scmp.lt.s32.totalorder %s18, 1
          %s126 = scalar_select %p125, %s18, 1
          %p127 = scmp.lt.s32.totalorder %s19, 0
          %s128 = scalar_select %p127, %s19, 0
          %s129 = sadd.s32 %s128, %s126
          %s130 = smul.addr %s129, 8
          %s131 = scalar_lea.vmem %s0, %s130
        $region20: #{tpu_custom_call.1} parent=15 // pred_fallthru
          _
        // Predicated region
        $region21: #{tpu_custom_call.1} parent=15 // pred_check
          %p132 = pneg %p71
        $region22: #{tpu_custom_call.1} parent=15 // pred_check_branch
          %134 = sbr.rel (%p132) target = $region24
        $region23: #{tpu_custom_call.1} parent=15 // pred_region
          %p135 = scmp.lt.s32.totalorder %s18, 1
          %s136 = scalar_select %p135, %s18, 1
          %s137 = smul.addr %s136, 8
          %s138 = scalar_lea.vmem %s1, %s137
        $region24: #{tpu_custom_call.1} parent=15 // pred_fallthru
          _
      $region16: #{tpu_custom_call.1} parent=5 // pred_fallthru
        _
      %p139 = scmp.le.s32.totalorder 1, %s11
      %p140 = scmp.lt.s32.totalorder %s11, 3
      %p141 = pnand %p139, %p140
      %p142 = pneg %p141
      // Predicated region
      $region25: #{tpu_custom_call.1} parent=5 // pred_check
        _
      $region26: #{tpu_custom_call.1} parent=5 // pred_check_branch
        %144 = sbr.rel (%p141) target = $region28
      $region27: #{tpu_custom_call.1} parent=5 // pred_region
        %s145 = ssub.s32 %s11, 1
        %p146 = scmp.lt.s32.totalorder %s20, 1
        %s147 = scalar_select %p146, %s20, 1
        %p148 = scmp.lt.s32.totalorder %s21, 0
        %s149 = scalar_select %p148, %s21, 0
        %s150 = sadd.s32 %s149, %s147
        %s151 = smul.addr %s150, 8
        %s152 = scalar_lea.vmem %s0, %s151
        %p153 = pneg %p51
        %p154 = pneg %p48
        %p155 = scmp.lt.s32.totalorder %s20, 1
        %s156 = scalar_select %p155, %s20, 1
        %s157 = smul.addr %s156, 8
        %s158 = scalar_lea.vmem %s1, %s157
        %p159 = pneg %p77
        %p160 = pneg %p74
        %p161 = pneg %p103
        %p162 = pneg %p100
        %s163 = sand.u32 %s90, 1
        %s164 = scalar_lea.sflag [#allocation5], %s163
        %s165 = sand.u32 %s90, 1
        %s166 = smul.addr %s165, 8
        %s167 = scalar_lea.vmem [#allocation4], %s166
        %p168 = scmp.lt.s32.totalorder %s20, 1
        %s169 = scalar_select %p168, %s20, 1
        %p170 = scmp.lt.s32.totalorder %s21, 0
        %s171 = scalar_select %p170, %s21, 0
        %s172 = sadd.s32 %s171, %s169
        %s173 = smul.addr %s172, 8
        %s174 = scalar_lea.vmem %s0, %s173
        %p175 = scmp.lt.s32.totalorder %s20, 1
        %s176 = scalar_select %p175, %s20, 1
        %s177 = smul.addr %s176, 8
        %s178 = scalar_lea.vmem %s1, %s177
        %v179 = vld [vmem:[%s174] sm:$0xff]
        %v180 = vlaneseq
        %v181 = vand.u32 %v180, 127
        %vm182 = vcmask 261120
        %v183 = vsel %vm182, %v179, -inf
        %184 = vmax.xlane.f32.xlu0 %v183
        %v185 = vpop.xlane.xlu0 %184
        %vm186 = vcmp.eq.f32.partialorder %v179, %v185
        %v187 = vsel %vm186, %v181, 32
        %v188 = vsel %vm182, %v187, 2147483647
        %v189 = vand.u32 %v188, 65535
        %v190 = vshra.s32 %v188, 16
        %v191 = vcvt.s32.f32 %v189
        %v192 = vcvt.s32.f32 %v190
        %193 = vmin.xlane.f32.xlu0 %v192
        %v194 = vpop.xlane.xlu0 %193
        %vm195 = vcmp.eq.f32.partialorder %v192, %v194
        %v196 = vsel %vm195, %v191, inf
        %197 = vmin.xlane.f32.xlu0 %v196
        %v198 = vpop.xlane.xlu0 %197
        %v199 = vcvt.f32.s32 %v198
        %v200 = vcvt.f32.s32 %v194
        %v201 = vshll.u32 %v200, 16
        %v202 = vadd.s32 %v201, %v199
        %s203 = smul.u32 %s21, 32
        %v204 = vstv %s203
        %v205 = vadd.s32 %v202, %v204
        %v206 = vlaneseq
        %v207 = vshrl.u32 %v206, 7
        %s208 = smul.u32 %s20, 8
        %v209 = vstv %s208
        %v210 = vadd.s32 %v209, %v207
        %vm211 = vcmp.lt.s32.totalorder %v210, 16
        %v212 = vld [vmem:[%s178] sm:$0xff]
        %vm213 = vcmp.eq.s32.totalorder %v205, %v212
        %vm214 = vmand %vm211, %vm213
        %v215 = vsel %vm214, 1, 0
        %vm216 = vcmask 7168
        %v217 = vsel %vm216, %v215, 0
        %v218 = vand.u32 %v217, 65535
        %v219 = vshrl.u32 %v217, 16
        %v220 = vcvt.s32.f32 %v218
        %v221 = vcvt.s32.f32 %v219
        %222 = vadd.xlane.f32.xlu0 %v220
        %v223 = vpop.xlane.xlu0 %222
        %224 = vadd.xlane.f32.xlu0 %v221
        %v225 = vpop.xlane.xlu0 %224
        %v226 = vcvt.f32.s32 %v223
        %v227 = vcvt.f32.s32 %v225
        %v228 = vshll.u32 %v227, 16
        %v229 = vadd.s32 %v228, %v226
        %v230 = vrot.slane %v229, 4
        %v231 = vadd.s32 %v229, %v230
        %v232 = vrot.slane %v231, 2
        %v233 = vadd.s32 %v231, %v232
        %v234 = vrot.slane %v233, 1
        %v235 = vadd.s32 %v233, %v234
        %s236 = vtos %v235
        %v237 = vstv %s236
        %238 = vst [vmem:[%s167] sm:$0xff] %v237
        %s239 = sand.u32 %s90, 1
        %s240 = scalar_lea.sflag [#allocation5], %s239
        %s241 = sand.u32 %s90, 1
        %s242 = smul.addr %s241, 8
        %s243 = scalar_lea.vmem [#allocation4], %s242
        // Predicated region
        $region29: #{tpu_custom_call.1} parent=27 // pred_check
          %p244 = pneg %p100
        $region30: #{tpu_custom_call.1} parent=27 // pred_check_branch
          %246 = sbr.rel (%p244) target = $region32
        $region31: #{tpu_custom_call.1} parent=27 // pred_region
          %s248 = ssub.s32 128, 128
          %249 = vsyncadd %s240, %s248
          %s250 = smul.addr %s20, 128
          %s251 = scalar_lea.hbm %s2, %s250
          %s253 = sshll.u32 %s243, 4
          %s254 = int_to_ptr.vmem [resolvable:$true] %s253
          %256 = dma.vmem_to_hbm [thread:$0]  %s254, 128, %s251, %s240
        $region32: #{tpu_custom_call.1} parent=27 // pred_fallthru
          _
      $region28: #{tpu_custom_call.1} parent=5 // pred_fallthru
        _
      %p257 = scmp.le.s32.totalorder 2, %s11
      // Predicated region
      $region33: #{tpu_custom_call.1} parent=5 // pred_check
        %p258 = pneg %p257
      $region34: #{tpu_custom_call.1} parent=5 // pred_check_branch
        %260 = sbr.rel (%p258) target = $region36
      $region35: #{tpu_custom_call.1} parent=5 // pred_region
        %s261 = ssub.s32 %s11, 2
        // Predicated region
        $region37: #{tpu_custom_call.1} parent=35 // pred_check
          %p262 = pneg %p106
        $region38: #{tpu_custom_call.1} parent=35 // pred_check_branch
          %264 = sbr.rel (%p262) target = $region40
        $region39: #{tpu_custom_call.1} parent=35 // pred_region
          %s265 = sand.u32 %s91, 1
          %s266 = scalar_lea.sflag [#allocation5], %s265
          %s267 = sand.u32 %s91, 1
          %s268 = smul.addr %s267, 8
          %s269 = scalar_lea.vmem [#allocation4], %s268
          %270 = dma.done %s266, 128
        $region40: #{tpu_custom_call.1} parent=35 // pred_fallthru
          _
      $region36: #{tpu_custom_call.1} parent=5 // pred_fallthru
        _
    $region6: #{tpu_custom_call.1} parent=1 // loop_footer
      %s15 = sadd.s32 1, %s11
    $region7: #{tpu_custom_call.1} parent=1 // loop_footer_branch
      %10 = sbr.rel target = $region3
    $region8: #{tpu_custom_call.1} parent=1 // loop_exit
      _
    %271 = vsyncpa [#allocation5], 1
    %s272 = scalar_lea.sflag [#allocation5], 1
    %273 = vsyncpa %s272, 1

</llo_original>
